<compile_context>
chip_gen: v7x
topology: tpu7x:2x2x1
jax: 0.10.0
libtpu: 0.0.40
codegen_flags: <defaults>
</compile_context>

<pallas_src>
import jax
import jax.numpy as jnp
from jax.experimental import pallas as pl
from jax.experimental.pallas import tpu as pltpu


# ----------------------------- kernels ------------------------------------ #

def _ca_fused_kernel(x_ref, w1_ref, b1_ref, w2_ref, b2_ref, o_ref):
    # x_ref: (nb, C, HWp) in the I/O dtype; all math in f32 (v5e-safe).
    xb = x_ref[...].astype(jnp.float32)
    y = jnp.sum(xb, axis=-1)                              # (nb, C); 1/HW folded into w1
    h = jnp.dot(y, w1_ref[...], preferred_element_type=jnp.float32) + b1_ref[...]
    h = jnp.maximum(h, 0.0)                               # (nb, Cr)
    s = jnp.dot(h, w2_ref[...], preferred_element_type=jnp.float32) + b2_ref[...]
    s = jax.nn.sigmoid(s)                                 # (nb, C)
    o_ref[...] = (xb * s[:, :, None]).astype(o_ref.dtype)


def _ca_pool_kernel(x_ref, ysum_ref):
    # Accumulate per-(n, c) spatial sums over HW tiles.  ysum_ref (N, C) f32
    # is resident in VMEM for the whole grid (constant output index_map).
    n = pl.program_id(0)
    h = pl.program_id(1)

    @pl.when((n == 0) & (h == 0))
    def _():
        ysum_ref[...] = jnp.zeros_like(ysum_ref)

    part = jnp.sum(x_ref[...].astype(jnp.float32), axis=-1)          # (1, C)
    row = jax.lax.broadcasted_iota(jnp.int32, ysum_ref.shape, 0)     # (N, C)
    ysum_ref[...] = ysum_ref[...] + jnp.where(row == n, part, 0.0)


def _ca_scale_kernel(x_ref, ysum_ref, w1_ref, b1_ref, w2_ref, b2_ref, o_ref):
    # Recompute the tiny SE for sample n (hidden under DMA) and scale the tile.
    n = pl.program_id(0)
    row = jax.lax.broadcasted_iota(jnp.int32, ysum_ref.shape, 0)
    y = jnp.sum(jnp.where(row == n, ysum_ref[...], 0.0), axis=0, keepdims=True)  # (1, C)
    h = jnp.maximum(
        jnp.dot(y, w1_ref[...], preferred_element_type=jnp.float32) + b1_ref[...], 0.0)
    s = jax.nn.sigmoid(
        jnp.dot(h, w2_ref[...], preferred_element_type=jnp.float32) + b2_ref[...])  # (1, C)
    xb = x_ref[...].astype(jnp.float32)                   # (1, C, thw)
    o_ref[...] = (xb * s[:, :, None]).astype(o_ref.dtype)


# ----------------------------- wrapper ------------------------------------ #

def _vmem_budgets():
    """Generation-aware (block budget, vmem_limit_bytes)."""
    cap = None
    try:
        cap = getattr(pltpu.get_tpu_info(), "vmem_capacity_bytes", None)
    except Exception:
        cap = None
    if cap is None:
        cap = 64 * 1024 * 1024                    # assume the smallest (v7x-like)
    if cap >= 100 * 1024 * 1024:                  # v5e / v6e: 128 MiB physical VMEM
        return 48 * 1024 * 1024, 96 * 1024 * 1024
    return 24 * 1024 * 1024, 32 * 1024 * 1024     # v7x (64 MiB): keep headroom


def ca_layer_pallas(x_nchw, w1, b1, w2, b2, *, donate_input=False, _force_hw_tile=None):
    """Channel-attention forward.

    x_nchw: (N, C, H, W), float32 or bfloat16 (bf16 halves HBM traffic; math is f32).
    w1: (C, Cr)   (= conv1 weight transposed),  b1: (1, Cr)
    w2: (Cr, C)   (= conv2 weight transposed),  b2: (1, C)
    donate_input: set True only when x is dead after this call (output aliases x).
    returns: (N, C, H, W) in x's dtype.
    """
    N, C, H, W = x_nchw.shape
    HW = H * W
    Cr = w1.shape[1]
    io_dtype = x_nchw.dtype
    itemsize = x_nchw.dtype.itemsize

    # Lane-density guard: pad HW up to a multiple of 128 (zeros; harmless for
    # the pooled mean because 1/HW is folded into w1 below).
    HW_pad = max(128, ((HW + 127) // 128) * 128)
    x_nlc = x_nchw.reshape(N, C, HW)
    if HW_pad != HW:
        x_nlc = jnp.pad(x_nlc, ((0, 0), (0, 0), (0, HW_pad - HW)))

    # Fold the mean divisor (true HW, not padded) into the first SE weight.
    w1_eff = w1.astype(jnp.float32) * (1.0 / float(HW))
    b1f = b1.astype(jnp.float32)
    w2f = w2.astype(jnp.float32)
    b2f = b2.astype(jnp.float32)

    budget, vmem_limit = _vmem_budgets()
    alias_kwargs = {"input_output_aliases": {0: 0}} if donate_input else {}

    # Per-sample VMEM footprint of the fused path: 2x in + 2x out double-
    # buffered I/O blocks plus ~3 f32-sized in-kernel temporaries.
    per_sample_vmem = C * HW_pad * (4 * itemsize + 3 * 4)
    use_fused = (_force_hw_tile is None) and (per_sample_vmem <= budget)

    if use_fused:
        nb = max(1, min(N, budget // per_sample_vmem))
        if N >= 2:
            # Keep >= 2 grid steps so both v7x TensorCores get work.
            nb = min(nb, (N + 1) // 2)
        grid_n = pl.cdiv(N, nb)

        out_nlc = pl.pallas_call(
            _ca_fused_kernel,
            out_shape=jax.ShapeDtypeStruct((N, C, HW_pad), io_dtype),
            grid_spec=pltpu.PrefetchScalarGridSpec(
                num_scalar_prefetch=0,
                grid=(grid_n,),
                in_specs=[
                    pl.BlockSpec((nb, C, HW_pad), lambda n: (n, 0, 0)),  # x
                    pl.BlockSpec((C, Cr), lambda n: (0, 0)),             # w1 (invariant)
                    pl.BlockSpec((1, Cr), lambda n: (0, 0)),             # b1
                    pl.BlockSpec((Cr, C), lambda n: (0, 0)),             # w2
                    pl.BlockSpec((1, C), lambda n: (0, 0)),              # b2
                ],
                out_specs=pl.BlockSpec((nb, C, HW_pad), lambda n: (n, 0, 0)),
            ),
            compiler_params=pltpu.CompilerParams(
                dimension_semantics=("parallel",),
                vmem_limit_bytes=vmem_limit,
            ),
            **alias_kwargs,
        )(x_nlc, w1_eff, b1f, w2f, b2f)
    else:
        # HW-tiled two-pass fallback: pool-accumulate, then scale.
        per_col = C * (4 * itemsize + 3 * 4)        # VMEM bytes per HW element
        if per_col * 128 > budget:
            # TODO(synk): add channel tiling for extremely large C.
            raise NotImplementedError("ca_layer_pallas: C too large for the HW-tiled fallback")
        if _force_hw_tile is not None:
            thw = int(_force_hw_tile)
        else:
            thw_max = min(HW_pad, max(128, (budget // per_col) // 128 * 128))
            thw = 128
            cand = thw_max
            while cand >= 128:
                if HW_pad % cand == 0:
                    thw = cand
                    break
                cand -= 128
        assert thw % 128 == 0 and HW_pad % thw == 0
        n_hw = HW_pad // thw

        # Pass 1: pooled spatial sums (N, C), accumulated across HW tiles.
        ysum = pl.pallas_call(
            _ca_pool_kernel,
            out_shape=jax.ShapeDtypeStruct((N, C), jnp.float32),
            grid_spec=pltpu.PrefetchScalarGridSpec(
                num_scalar_prefetch=0,
                grid=(N, n_hw),
                in_specs=[pl.BlockSpec((1, C, thw), lambda n, h: (n, 0, h))],
                out_specs=pl.BlockSpec((N, C), lambda n, h: (0, 0)),
            ),
            compiler_params=pltpu.CompilerParams(
                dimension_semantics=("arbitrary", "arbitrary"),
                vmem_limit_bytes=vmem_limit,
            ),
        )(x_nlc)

        # Pass 2: SE + scale, streaming x tile by tile.
        out_nlc = pl.pallas_call(
            _ca_scale_kernel,
            out_shape=jax.ShapeDtypeStruct((N, C, HW_pad), io_dtype),
            grid_spec=pltpu.PrefetchScalarGridSpec(
                num_scalar_prefetch=0,
                grid=(N, n_hw),
                in_specs=[
                    pl.BlockSpec((1, C, thw), lambda n, h: (n, 0, h)),   # x
                    pl.BlockSpec((N, C), lambda n, h: (0, 0)),           # pooled sums
                    pl.BlockSpec((C, Cr), lambda n, h: (0, 0)),          # w1
                    pl.BlockSpec((1, Cr), lambda n, h: (0, 0)),          # b1
                    pl.BlockSpec((Cr, C), lambda n, h: (0, 0)),          # w2
                    pl.BlockSpec((1, C), lambda n, h: (0, 0)),           # b2
                ],
                out_specs=pl.BlockSpec((1, C, thw), lambda n, h: (n, 0, h)),
            ),
            compiler_params=pltpu.CompilerParams(
                dimension_semantics=("parallel", "parallel"),
                vmem_limit_bytes=vmem_limit,
            ),
            **alias_kwargs,
        )(x_nlc, ysum, w1_eff, b1f, w2f, b2f)

    if HW_pad != HW:
        out_nlc = out_nlc[:, :, :HW]
    return out_nlc.reshape(N, C, H, W)


def _reference(x, w1, b1_vec, w2, b2_vec):
    # Pure-JAX reference of the PyTorch forward (NCHW).
    y = jnp.mean(x, axis=(2, 3))                      # (N, C)
    h = jnp.maximum(y @ w1 + b1_vec, 0.0)             # (N, Cr)
    s = jax.nn.sigmoid(h @ w2 + b2_vec)               # (N, C)
    return x * s[:, :, None, None]


if __name__ == "__main__":
    # Module config: channel=32, reduction=8 -> Cr=4; 16x16 feature map so
    # HW = 256 (lane-dense multiple of 128).
    N, C, H, W = 2, 32, 16, 16
    reduction = 8
    Cr = C // reduction

    key = jax.random.PRNGKey(0)
    k_x, k_x2, k_w1, k_b1, k_w2, k_b2 = jax.random.split(key, 6)

    x = jax.random.normal(k_x, (N, C, H, W), dtype=jnp.float32)
    # Conv2d(C, Cr, 1) weight is (Cr, C, 1, 1); we store the matmul form (C, Cr).
    w1 = jax.random.normal(k_w1, (C, Cr), dtype=jnp.float32) * 0.1
    b1 = jax.random.normal(k_b1, (1, Cr), dtype=jnp.float32) * 0.1
    # Conv2d(Cr, C, 1) weight is (C, Cr, 1, 1); matmul form (Cr, C).
    w2 = jax.random.normal(k_w2, (Cr, C), dtype=jnp.float32) * 0.1
    b2 = jax.random.normal(k_b2, (1, C), dtype=jnp.float32) * 0.1

    ref = _reference(x, w1, b1.reshape(-1), w2, b2.reshape(-1))

    # 1) Fused f32 path.
    out = jax.block_until_ready(ca_layer_pallas(x, w1, b1, w2, b2))
    assert out.shape == (N, C, H, W)
    assert jnp.allclose(out, ref, atol=1e-5, rtol=1e-5), "fused f32 mismatch"

    # 2) bf16 I/O path (arithmetic stays f32 in-kernel) -- halves HBM traffic.
    x_bf16 = x.astype(jnp.bfloat16)
    out_bf16 = jax.block_until_ready(ca_layer_pallas(x_bf16, w1, b1, w2, b2))
    assert out_bf16.dtype == jnp.bfloat16
    assert jnp.allclose(out_bf16.astype(jnp.float32), ref, atol=5e-2, rtol=5e-2), \
        "bf16 I/O mismatch"

    # 3) HW-tiled two-pass fallback (forced here; taken automatically when one
    #    sample's (C, HW) block no longer fits the VMEM budget).
    out_tiled = jax.block_until_ready(
        ca_layer_pallas(x, w1, b1, w2, b2, _force_hw_tile=128))
    assert jnp.allclose(out_tiled, ref, atol=1e-5, rtol=1e-5), "tiled fallback mismatch"

    # 4) Non-lane-dense spatial shape (12x12 -> HW=144, padded to 256 internally).
    x2 = jax.random.normal(k_x2, (N, C, 12, 12), dtype=jnp.float32)
    ref2 = _reference(x2, w1, b1.reshape(-1), w2, b2.reshape(-1))
    out2 = jax.block_until_ready(ca_layer_pallas(x2, w1, b1, w2, b2))
    assert jnp.allclose(out2, ref2, atol=1e-5, rtol=1e-5), "padded-HW mismatch"

    # 5) Aliased output (donate_input=True): x_alias is not used afterwards.
    x_alias = x + 0.0
    out_alias = jax.block_until_ready(
        ca_layer_pallas(x_alias, w1, b1, w2, b2, donate_input=True))
    assert jnp.allclose(out_alias, ref, atol=1e-5, rtol=1e-5), "aliased-output mismatch"

    print("KERNEL_OK")
</pallas_src>

<mosaic_0001>
module attributes {stable_mosaic.version = 11 : i64} {
  func.func @_ca_fused_kernel(%arg0: i32, %arg1: memref<1x32x256xf32, #tpu.memory_space<vmem>>, %arg2: memref<32x4xf32, #tpu.memory_space<vmem>>, %arg3: memref<1x4xf32, #tpu.memory_space<vmem>>, %arg4: memref<4x32xf32, #tpu.memory_space<vmem>>, %arg5: memref<1x32xf32, #tpu.memory_space<vmem>>, %arg6: memref<1x32x256xf32, #tpu.memory_space<vmem>>) attributes {dimension_semantics = [#tpu.dimension_semantics<parallel>], iteration_bounds = array<i64: 2>, scalar_prefetch = 0 : i64, scratch_operands = 0 : i64, tpu.core_type = #tpu.core_type<tc>, window_params = [{transform_indices = @transform_0, window_bounds = array<i64: 1, 32, 256>}, {pipeline_mode = #tpu.pipeline_mode<synchronous>, transform_indices = @transform_1, window_bounds = array<i64: 32, 4>}, {pipeline_mode = #tpu.pipeline_mode<synchronous>, transform_indices = @transform_2, window_bounds = array<i64: 1, 4>}, {pipeline_mode = #tpu.pipeline_mode<synchronous>, transform_indices = @transform_3, window_bounds = array<i64: 4, 32>}, {pipeline_mode = #tpu.pipeline_mode<synchronous>, transform_indices = @transform_4, window_bounds = array<i64: 1, 32>}, {transform_indices = @transform_5, window_bounds = array<i64: 1, 32, 256>}]} {
    %c0 = arith.constant 0 : index
    %c0_0 = arith.constant 0 : index
    %c0_1 = arith.constant 0 : index
    %0 = vector.load %arg1[%c0, %c0_0, %c0_1] : memref<1x32x256xf32, #tpu.memory_space<vmem>>, vector<1x32x256xf32>
    %cst = arith.constant dense<0.000000e+00> : vector<1x32xf32>
    %1 = vector.multi_reduction <add>, %0, %cst [2] : vector<1x32x256xf32> to vector<1x32xf32>
    %c0_2 = arith.constant 0 : index
    %c0_3 = arith.constant 0 : index
    %2 = vector.load %arg2[%c0_2, %c0_3] : memref<32x4xf32, #tpu.memory_space<vmem>>, vector<32x4xf32>
    %cst_4 = arith.constant dense<0.000000e+00> : vector<1x4xf32>
    %3 = tpu.matmul %1, %2, %cst_4 {dimension_numbers = #tpu.dot_dimension_numbers<[1], [0], [0], [1], [0, 0, 1, 1], [], []>} : vector<1x32xf32>, vector<32x4xf32>, vector<1x4xf32> -> vector<1x4xf32>
    %c0_5 = arith.constant 0 : index
    %c0_6 = arith.constant 0 : index
    %4 = vector.load %arg3[%c0_5, %c0_6] : memref<1x4xf32, #tpu.memory_space<vmem>>, vector<1x4xf32>
    %5 = arith.addf %3, %4 : vector<1x4xf32>
    %cst_7 = arith.constant 0.000000e+00 : f32
    %6 = vector.broadcast %cst_7 : f32 to vector<1x4xf32>
    %7 = arith.maximumf %5, %6 : vector<1x4xf32>
    %c0_8 = arith.constant 0 : index
    %c0_9 = arith.constant 0 : index
    %8 = vector.load %arg4[%c0_8, %c0_9] : memref<4x32xf32, #tpu.memory_space<vmem>>, vector<4x32xf32>
    %cst_10 = arith.constant dense<0.000000e+00> : vector<1x32xf32>
    %9 = tpu.matmul %7, %8, %cst_10 {dimension_numbers = #tpu.dot_dimension_numbers<[1], [0], [0], [1], [0, 0, 1, 1], [], []>} : vector<1x4xf32>, vector<4x32xf32>, vector<1x32xf32> -> vector<1x32xf32>
    %c0_11 = arith.constant 0 : index
    %c0_12 = arith.constant 0 : index
    %10 = vector.load %arg5[%c0_11, %c0_12] : memref<1x32xf32, #tpu.memory_space<vmem>>, vector<1x32xf32>
    %11 = arith.addf %9, %10 : vector<1x32xf32>
    %12 = arith.negf %11 : vector<1x32xf32>
    %13 = math.exp %12 : vector<1x32xf32>
    %cst_13 = arith.constant 1.000000e+00 : f32
    %14 = vector.broadcast %cst_13 : f32 to vector<1x32xf32>
    %15 = arith.addf %14, %13 : vector<1x32xf32>
    %16 = arith.divf %14, %15 : vector<1x32xf32>
    %17 = vector.shape_cast %16 : vector<1x32xf32> to vector<1x32x1xf32>
    %18 = vector.broadcast %17 : vector<1x32x1xf32> to vector<1x32x256xf32>
    %19 = arith.mulf %0, %18 : vector<1x32x256xf32>
    %c0_14 = arith.constant 0 : index
    %c0_15 = arith.constant 0 : index
    %c0_16 = arith.constant 0 : index
    %20 = vector.load %arg6[%c0_14, %c0_15, %c0_16] : memref<1x32x256xf32, #tpu.memory_space<vmem>>, vector<1x32x256xf32>
    tpu.vector_store %arg6[%c0_14, %c0_15, %c0_16], %19 {strides = array<i32>} : memref<1x32x256xf32, #tpu.memory_space<vmem>>, vector<1x32x256xf32>,
    return
  }
  func.func @transform_0(%arg0: i32) -> (i32, i32, i32) {
    %c0_i32 = arith.constant 0 : i32
    %c0_i32_0 = arith.constant 0 : i32
    %c0_i32_1 = arith.constant 0 : i32
    return %arg0, %c0_i32, %c0_i32_0 : i32, i32, i32
  }
  func.func @transform_1(%arg0: i32) -> (i32, i32) {
    %c0_i32 = arith.constant 0 : i32
    %c0_i32_0 = arith.constant 0 : i32
    %c0_i32_1 = arith.constant 0 : i32
    return %c0_i32, %c0_i32_0 : i32, i32
  }
  func.func @transform_2(%arg0: i32) -> (i32, i32) {
    %c0_i32 = arith.constant 0 : i32
    %c0_i32_0 = arith.constant 0 : i32
    %c0_i32_1 = arith.constant 0 : i32
    return %c0_i32, %c0_i32_0 : i32, i32
  }
  func.func @transform_3(%arg0: i32) -> (i32, i32) {
    %c0_i32 = arith.constant 0 : i32
    %c0_i32_0 = arith.constant 0 : i32
    %c0_i32_1 = arith.constant 0 : i32
    return %c0_i32, %c0_i32_0 : i32, i32
  }
  func.func @transform_4(%arg0: i32) -> (i32, i32) {
    %c0_i32 = arith.constant 0 : i32
    %c0_i32_0 = arith.constant 0 : i32
    %c0_i32_1 = arith.constant 0 : i32
    return %c0_i32, %c0_i32_0 : i32, i32
  }
  func.func @transform_5(%arg0: i32) -> (i32, i32, i32) {
    %c0_i32 = arith.constant 0 : i32
    %c0_i32_0 = arith.constant 0 : i32
    %c0_i32_1 = arith.constant 0 : i32
    return %arg0, %c0_i32, %c0_i32_0 : i32, i32, i32
  }
}

</mosaic_0001>

<llo_original>
// kernel: tpu_custom_call.1
$region0: #{tpu_custom_call.1}
  #allocation0 [shape = 'u32[]', space=smem, size = 0x4, offset = 0x4, fixed_abs, tag = 'smem constant byte address 0x4 - core index']
  #allocation1 [shape = 'u32[144,128]{1,0:T(1,128)}', space=vmem, size = 0x12000, scoped, tag = 'internal scratch']
  %s0 = inlined_call_operand.hbm [shape: f32[2,32,256], index: 0, kind: input, shape index: {}]
  %s1 = inlined_call_operand.vmem [shape: f32[32,4], index: 1, kind: input, shape index: {}]
  %s2 = inlined_call_operand.vmem [shape: f32[1,4], index: 2, kind: input, shape index: {}]
  %s3 = inlined_call_operand.vmem [shape: f32[4,32], index: 3, kind: input, shape index: {}]
  %s4 = inlined_call_operand.vmem [shape: f32[1,32], index: 4, kind: input, shape index: {}]
  %s5 = inlined_call_operand.hbm [shape: f32[2,32,256], index: 5, kind: output, shape index: {}]
  %s6 = sld [smem:[#allocation0]]
  $region57: #{tpu_custom_call.1} parent=0
    _
  %s8 = ssub.s32 1, %s6
  %s9 = scalar_select 0, %s8, %s6
  $region1: #{tpu_custom_call.1} parent=0
    #allocation2 [shape = 'u8[65536]{0}', space=vmem, size = 0x10000, scoped, tag = 'input window, operand 0']
    #allocation3 [shape = 's32[2]{0}', space=sflag, size = 0x8, scoped, tag = 'scoped memory for tpu_custom_call.1']
    #allocation4 [shape = 's32[2]{0}', space=sflag, size = 0x8, scoped, tag = 'scoped memory for tpu_custom_call.1']
    #allocation5 [shape = 'u8[65536]{0}', space=vmem, size = 0x10000, scoped, tag = 'output window, operand 0']
    %10 = vsyncpa [#allocation3], 0
    %s11 = scalar_lea.sflag [#allocation3], 1
    %12 = vsyncpa %s11, 0
    %13 = vsyncpa [#allocation4], 0
    %s14 = scalar_lea.sflag [#allocation4], 1
    %15 = vsyncpa %s14, 0
    loop: start=0, step=1, limit=4
    $region2: #{tpu_custom_call.1} parent=1 // loop_pre_header
      _
    $region3: #{tpu_custom_call.1} parent=1 // loop_header
      %s17 = sphi 0, %s21
      %p18 = scmp.ge.s32.totalorder %s17, 4
      %s27 = sphi 0, %s29
      %s30 = sphi 0, %s27
      %s31 = sphi 0, %s30
      %s47 = sphi 0, %s31
      %s51 = sphi 0, %s51
      %s53 = sphi 0, %s51
      %s54 = sphi 0, %s53
      %s68 = sphi 0, %s54
      %s72 = sphi 0, %s72
      %s74 = sphi 0, %s72
      %s75 = sphi 0, %s74
      %s89 = sphi 0, %s75
      %s93 = sphi 0, %s93
      %s95 = sphi 0, %s93
      %s96 = sphi 0, %s95
      %s110 = sphi 0, %s96
      %s114 = sphi 0, %s114
      %s116 = sphi 0, %s114
      %s117 = sphi 0, %s116
      %s131 = sphi 0, %s117
      %s137 = sphi 0, %s139
      %s140 = sphi 0, %s137
      %s141 = sphi 0, %s140
      %s157 = sphi 0, %s141
    $region4: #{tpu_custom_call.1} parent=1 // loop_header_branch
      %20 = sbr.rel (%p18) target = $region8
    $region5: #{tpu_custom_call.1} parent=1 // loop_body
      %s22 = ssub.s32 %s17, 1
      %s23 = ssub.s32 %s17, 2
      %s24 = sadd.s32 %s17, 1
      %s25 = ssub.s32 %s17, %s24
      %p26 = scmp.eq.s32.totalorder %s25, 0
      %s28 = sadd.s32 %s27, 1
      %s29 = scalar_select %p26, %s27, %s28
      %p32 = pneg %p26
      %p33 = scmp.eq.s32.totalorder %s17, 1
      %p34 = por %p32, %p33
      %p35 = scmp.ne.s32.totalorder %s27, %s30
      %p36 = scmp.eq.s32.totalorder %s17, 0
      %p37 = por %p35, %p36
      %p38 = scmp.ne.s32.totalorder %s27, %s30
      %p39 = scmp.eq.s32.totalorder %s22, 1
      %p40 = por %p38, %p39
      %p41 = scmp.ne.s32.totalorder %s30, %s31
      %p42 = scmp.eq.s32.totalorder %s22, 0
      %p43 = por %p41, %p42
      %p44 = scmp.ne.s32.totalorder %s30, %s31
      %p45 = scmp.eq.s32.totalorder %s23, 1
      %p46 = por %p44, %p45
      %p48 = scmp.ne.s32.totalorder %s31, %s47
      %p49 = scmp.eq.s32.totalorder %s23, 0
      %p50 = por %p48, %p49
      %s52 = sadd.s32 %s51, 1
      %p55 = scmp.eq.s32.totalorder %s17, 1
      %p56 = scmp.ne.s32.totalorder %s51, %s53
      %p57 = scmp.eq.s32.totalorder %s17, 0
      %p58 = por %p56, %p57
      %p59 = scmp.ne.s32.totalorder %s51, %s53
      %p60 = scmp.eq.s32.totalorder %s22, 1
      %p61 = por %p59, %p60
      %p62 = scmp.ne.s32.totalorder %s53, %s54
      %p63 = scmp.eq.s32.totalorder %s22, 0
      %p64 = por %p62, %p63
      %p65 = scmp.ne.s32.totalorder %s53, %s54
      %p66 = scmp.eq.s32.totalorder %s23, 1
      %p67 = por %p65, %p66
      %p69 = scmp.ne.s32.totalorder %s54, %s68
      %p70 = scmp.eq.s32.totalorder %s23, 0
      %p71 = por %p69, %p70
      %s73 = sadd.s32 %s72, 1
      %p76 = scmp.eq.s32.totalorder %s17, 1
      %p77 = scmp.ne.s32.totalorder %s72, %s74
      %p78 = scmp.eq.s32.totalorder %s17, 0
      %p79 = por %p77, %p78
      %p80 = scmp.ne.s32.totalorder %s72, %s74
      %p81 = scmp.eq.s32.totalorder %s22, 1
      %p82 = por %p80, %p81
      %p83 = scmp.ne.s32.totalorder %s74, %s75
      %p84 = scmp.eq.s32.totalorder %s22, 0
      %p85 = por %p83, %p84
      %p86 = scmp.ne.s32.totalorder %s74, %s75
      %p87 = scmp.eq.s32.totalorder %s23, 1
      %p88 = por %p86, %p87
      %p90 = scmp.ne.s32.totalorder %s75, %s89
      %p91 = scmp.eq.s32.totalorder %s23, 0
      %p92 = por %p90, %p91
      %s94 = sadd.s32 %s93, 1
      %p97 = scmp.eq.s32.totalorder %s17, 1
      %p98 = scmp.ne.s32.totalorder %s93, %s95
      %p99 = scmp.eq.s32.totalorder %s17, 0
      %p100 = por %p98, %p99
      %p101 = scmp.ne.s32.totalorder %s93, %s95
      %p102 = scmp.eq.s32.totalorder %s22, 1
      %p103 = por %p101, %p102
      %p104 = scmp.ne.s32.totalorder %s95, %s96
      %p105 = scmp.eq.s32.totalorder %s22, 0
      %p106 = por %p104, %p105
      %p107 = scmp.ne.s32.totalorder %s95, %s96
      %p108 = scmp.eq.s32.totalorder %s23, 1
      %p109 = por %p107, %p108
      %p111 = scmp.ne.s32.totalorder %s96, %s110
      %p112 = scmp.eq.s32.totalorder %s23, 0
      %p113 = por %p111, %p112
      %s115 = sadd.s32 %s114, 1
      %p118 = scmp.eq.s32.totalorder %s17, 1
      %p119 = scmp.ne.s32.totalorder %s114, %s116
      %p120 = scmp.eq.s32.totalorder %s17, 0
      %p121 = por %p119, %p120
      %p122 = scmp.ne.s32.totalorder %s114, %s116
      %p123 = scmp.eq.s32.totalorder %s22, 1
      %p124 = por %p122, %p123
      %p125 = scmp.ne.s32.totalorder %s116, %s117
      %p126 = scmp.eq.s32.totalorder %s22, 0
      %p127 = por %p125, %p126
      %p128 = scmp.ne.s32.totalorder %s116, %s117
      %p129 = scmp.eq.s32.totalorder %s23, 1
      %p130 = por %p128, %p129
      %p132 = scmp.ne.s32.totalorder %s117, %s131
      %p133 = scmp.eq.s32.totalorder %s23, 0
      %p134 = por %p132, %p133
      %s135 = ssub.s32 %s17, %s24
      %p136 = scmp.eq.s32.totalorder %s135, 0
      %s138 = sadd.s32 %s137, 1
      %s139 = scalar_select %p136, %s137, %s138
      %p142 = pneg %p136
      %p143 = scmp.eq.s32.totalorder %s17, 1
      %p144 = por %p142, %p143
      %p145 = scmp.ne.s32.totalorder %s137, %s140
      %p146 = scmp.eq.s32.totalorder %s17, 0
      %p147 = por %p145, %p146
      %p148 = scmp.ne.s32.totalorder %s137, %s140
      %p149 = scmp.eq.s32.totalorder %s22, 1
      %p150 = por %p148, %p149
      %p151 = scmp.ne.s32.totalorder %s140, %s141
      %p152 = scmp.eq.s32.totalorder %s22, 0
      %p153 = por %p151, %p152
      %p154 = scmp.ne.s32.totalorder %s140, %s141
      %p155 = scmp.eq.s32.totalorder %s23, 1
      %p156 = por %p154, %p155
      %p158 = scmp.ne.s32.totalorder %s141, %s157
      %p159 = scmp.eq.s32.totalorder %s23, 0
      %p160 = por %p158, %p159
      %p161 = scmp.le.s32.totalorder 1, %s17
      %p162 = scmp.lt.s32.totalorder %s17, 3
      %p163 = pnand %p161, %p162
      %p164 = pneg %p163
      // Predicated region
      $region9: #{tpu_custom_call.1} parent=5 // pred_check
        _
      $region10: #{tpu_custom_call.1} parent=5 // pred_check_branch
        %166 = sbr.rel (%p163) target = $region12
      $region11: #{tpu_custom_call.1} parent=5 // pred_region
        %s167 = ssub.s32 %s17, 1
        // Predicated region
        $region13: #{tpu_custom_call.1} parent=11 // pred_check
          %p168 = pneg %p64
        $region14: #{tpu_custom_call.1} parent=11 // pred_check_branch
          %170 = sbr.rel (%p168) target = $region16
        $region15: #{tpu_custom_call.1} parent=11 // pred_region
          _
        $region16: #{tpu_custom_call.1} parent=11 // pred_fallthru
          _
        // Predicated region
        $region17: #{tpu_custom_call.1} parent=11 // pred_check
          %p171 = pneg %p85
        $region18: #{tpu_custom_call.1} parent=11 // pred_check_branch
          %173 = sbr.rel (%p171) target = $region20
        $region19: #{tpu_custom_call.1} parent=11 // pred_region
          _
        $region20: #{tpu_custom_call.1} parent=11 // pred_fallthru
          _
        // Predicated region
        $region21: #{tpu_custom_call.1} parent=11 // pred_check
          %p174 = pneg %p106
        $region22: #{tpu_custom_call.1} parent=11 // pred_check_branch
          %176 = sbr.rel (%p174) target = $region24
        $region23: #{tpu_custom_call.1} parent=11 // pred_region
          _
        $region24: #{tpu_custom_call.1} parent=11 // pred_fallthru
          _
        // Predicated region
        $region25: #{tpu_custom_call.1} parent=11 // pred_check
          %p177 = pneg %p127
        $region26: #{tpu_custom_call.1} parent=11 // pred_check_branch
          %179 = sbr.rel (%p177) target = $region28
        $region27: #{tpu_custom_call.1} parent=11 // pred_region
          _
        $region28: #{tpu_custom_call.1} parent=11 // pred_fallthru
          _
      $region12: #{tpu_custom_call.1} parent=5 // pred_fallthru
        _
      %p180 = scmp.lt.s32.totalorder %s17, 2
      // Predicated region
      $region29: #{tpu_custom_call.1} parent=5 // pred_check
        %p181 = pneg %p180
      $region30: #{tpu_custom_call.1} parent=5 // pred_check_branch
        %183 = sbr.rel (%p181) target = $region32
      $region31: #{tpu_custom_call.1} parent=5 // pred_region
        // Predicated region
        $region33: #{tpu_custom_call.1} parent=31 // pred_check
          %p184 = pneg %p37
        $region34: #{tpu_custom_call.1} parent=31 // pred_check_branch
          %186 = sbr.rel (%p184) target = $region36
        $region35: #{tpu_custom_call.1} parent=31 // pred_region
          %s187 = sand.u32 %s27, 1
          %s188 = scalar_lea.sflag [#allocation3], %s187
          %s189 = sand.u32 %s27, 1
          %s190 = smul.addr %s189, 64
          %s191 = scalar_lea.vmem [#allocation2], %s190
          %s193 = ssub.s32 1024, 1024
          %194 = vsyncadd %s188, %s193
          %s195 = smul.addr %s17, 8
          %s196 = smul.addr %s195, 128
          %s197 = scalar_lea.hbm %s0, %s196
          %s198 = sshll.u32 %s191, 4
          %s199 = int_to_ptr.vmem [resolvable:$true] %s198
          %204 = dma.hbm_to_vmem [thread:$0]  %s197, 1024, %s199, %s188, 256, 256, 16
        $region36: #{tpu_custom_call.1} parent=31 // pred_fallthru
          _
      $region32: #{tpu_custom_call.1} parent=5 // pred_fallthru
        _
      %p205 = scmp.le.s32.totalorder 1, %s17
      %p206 = scmp.lt.s32.totalorder %s17, 3
      %p207 = pnand %p205, %p206
      %p208 = pneg %p207
      // Predicated region
      $region37: #{tpu_custom_call.1} parent=5 // pred_check
        _
      $region38: #{tpu_custom_call.1} parent=5 // pred_check_branch
        %210 = sbr.rel (%p207) target = $region40
      $region39: #{tpu_custom_call.1} parent=5 // pred_region
        %s211 = ssub.s32 %s17, 1
        %s212 = sand.u32 %s30, 1
        %s213 = scalar_lea.sflag [#allocation3], %s212
        %s214 = sand.u32 %s30, 1
        %s215 = smul.addr %s214, 64
        %s216 = scalar_lea.vmem [#allocation2], %s215
        // Predicated region
        $region41: #{tpu_custom_call.1} parent=39 // pred_check
          %p217 = pneg %p43
        $region42: #{tpu_custom_call.1} parent=39 // pred_check_branch
          %219 = sbr.rel (%p217) target = $region44
        $region43: #{tpu_custom_call.1} parent=39 // pred_region
          %220 = dma.done %s213, 1024
        $region44: #{tpu_custom_call.1} parent=39 // pred_fallthru
          _
        %s221 = sand.u32 %s30, 1
        %s222 = scalar_lea.sflag [#allocation3], %s221
        %s223 = sand.u32 %s30, 1
        %s224 = smul.addr %s223, 64
        %s225 = scalar_lea.vmem [#allocation2], %s224
        %p226 = pneg %p43
        %p227 = pneg %p40
        %p228 = pneg %p64
        %p229 = pneg %p61
        %p230 = pneg %p85
        %p231 = pneg %p82
        %p232 = pneg %p106
        %p233 = pneg %p103
        %p234 = pneg %p127
        %p235 = pneg %p124
        %p236 = pneg %p153
        %p237 = pneg %p150
        %s238 = sand.u32 %s140, 1
        %s239 = scalar_lea.sflag [#allocation4], %s238
        %s240 = sand.u32 %s140, 1
        %s241 = smul.addr %s240, 64
        %s242 = scalar_lea.vmem [#allocation5], %s241
        %v243 = vld [vmem:[%s216] sm:$0xff]
        %v244 = vld [vmem:[%s216 + $0x8] sm:$0xff]
        %v245 = vld [vmem:[%s216 + $0x10] sm:$0xff]
        %v246 = vld [vmem:[%s216 + $0x18] sm:$0xff]
        %v247 = vld [vmem:[%s216 + $0x20] sm:$0xff]
        %v248 = vld [vmem:[%s216 + $0x28] sm:$0xff]
        %v249 = vld [vmem:[%s216 + $0x30] sm:$0xff]
        %v250 = vld [vmem:[%s216 + $0x38] sm:$0xff]
        %v251 = vadd.f32 %v243, %v244
        %252 = vadd.xlane.f32.xlu0 %v251
        %v253 = vpop.xlane.xlu0 %252
        %v254 = vadd.f32 %v245, %v246
        %255 = vadd.xlane.f32.xlu0 %v254
        %v256 = vpop.xlane.xlu0 %255
        %v257 = vadd.f32 %v247, %v248
        %258 = vadd.xlane.f32.xlu0 %v257
        %v259 = vpop.xlane.xlu0 %258
        %v260 = vadd.f32 %v249, %v250
        %261 = vadd.xlane.f32.xlu0 %v260
        %v262 = vpop.xlane.xlu0 %261
        %v263 = vld [vmem:[%s1] sm:$0xff]
        %v264 = vld [vmem:[%s1 + $0x8] sm:$0xff]
        %v265 = vld [vmem:[%s1 + $0x10] sm:$0xff]
        %v266 = vld [vmem:[%s1 + $0x18] sm:$0xff]
        %v267 = vld [vmem:[%s2] sm:$0x1]
        %v272 = vlaneseq
        %v273 = vand.u32 %v272, 127
        %v274 = vlaneseq
        %v275 = vshrl.u32 %v274, 7
        %v276 = vsub.s32 %v273, %v275
        %v277 = vrot.slane %v253, %v276
        %v278 = vadd.s32 %v273, 4294967288
        %v279 = vlaneseq
        %v280 = vshrl.u32 %v279, 7
        %v281 = vsub.s32 %v278, %v280
        %v282 = vrot.slane %v256, %v281
        %vm283 = vcmask 130112
        %v284 = vsel %vm283, %v282, %v277
        %v285 = vadd.s32 %v273, 4294967280
        %v286 = vlaneseq
        %v287 = vshrl.u32 %v286, 7
        %v288 = vsub.s32 %v285, %v287
        %v289 = vrot.slane %v259, %v288
        %vm290 = vcmask 195712
        %v291 = vsel %vm290, %v289, %v284
        %v292 = vadd.s32 %v273, 4294967272
        %v293 = vlaneseq
        %v294 = vshrl.u32 %v293, 7
        %v295 = vsub.s32 %v292, %v294
        %v296 = vrot.slane %v262, %v295
        %vm297 = vcmask 261312
        %v298 = vsel %vm297, %v296, %v291
        %vm299 = vcmask 261120
        %v300 = vsel %vm299, %v298, 0
        %302 = vmatprep.subr.mxu0 0.0
        %303 = vmatpush1.msra.mxu0 %v263
        %304 = vmatprep.subr.mxu0 0.0
        %305 = vmatpush1.msra.mxu0 %v264
        %306 = vmatprep.subr.mxu0 0.0
        %307 = vmatpush1.msra.mxu0 %v265
        %308 = vmatprep.subr.mxu0 0.0
        %309 = vmatpush1.msra.mxu0 %v266
        %310 = vmatprep.subr.mxu0 0.0
        %311 = vmatpush1.msra.mxu0 0.0
        %312 = vmatprep.subr.mxu0 0.0
        %313 = vmatpush1.msra.mxu0 0.0
        %314 = vmatprep.subr.mxu0 0.0
        %315 = vmatpush1.msra.mxu0 0.0
        %316 = vmatprep.subr.mxu0 0.0
        %317 = vmatpush1.msra.mxu0 0.0
        %318 = vmatprep.subr.mxu0 0.0
        %319 = vmatpush1.msra.mxu0 0.0
        %320 = vmatprep.subr.mxu0 0.0
        %321 = vmatpush1.msra.mxu0 0.0
        %322 = vmatprep.subr.mxu0 0.0
        %323 = vmatpush1.msra.mxu0 0.0
        %324 = vmatprep.subr.mxu0 0.0
        %325 = vmatpush1.msra.mxu0 0.0
        %326 = vmatprep.subr.mxu0 0.0
        %327 = vmatpush1.msra.mxu0 0.0
        %328 = vmatprep.subr.mxu0 0.0
        %329 = vmatpush1.msra.mxu0 0.0
        %330 = vmatprep.subr.mxu0 0.0
        %331 = vmatpush1.msra.mxu0 0.0
        %332 = vmatprep.subr.mxu0 0.0
        %333 = vmatpush1.msra.mxu0 0.0
        %334 = vmatprep.subr.mxu0 0.0
        %335 = vmatpush1.msra.mxu0 0.0
        %336 = vmatprep.subr.mxu0 0.0
        %337 = vmatpush1.msra.mxu0 0.0
        %338 = vmatprep.subr.mxu0 0.0
        %339 = vmatpush1.msra.mxu0 0.0
        %340 = vmatprep.subr.mxu0 0.0
        %341 = vmatpush1.msra.mxu0 0.0
        %342 = vmatprep.subr.mxu0 0.0
        %343 = vmatpush1.msra.mxu0 0.0
        %344 = vmatprep.subr.mxu0 0.0
        %345 = vmatpush1.msra.mxu0 0.0
        %346 = vmatprep.subr.mxu0 0.0
        %347 = vmatpush1.msra.mxu0 0.0
        %348 = vmatprep.subr.mxu0 0.0
        %349 = vmatpush1.msra.mxu0 0.0
        %350 = vmatprep.subr.mxu0 0.0
        %351 = vmatpush1.msra.mxu0 0.0
        %352 = vmatprep.subr.mxu0 0.0
        %353 = vmatpush1.msra.mxu0 0.0
        %354 = vmatprep.subr.mxu0 0.0
        %355 = vmatpush1.msra.mxu0 0.0
        %356 = vmatprep.subr.mxu0 0.0
        %357 = vmatpush1.msra.mxu0 0.0
        %358 = vmatprep.subr.mxu0 0.0
        %359 = vmatpush1.msra.mxu0 0.0
        %360 = vmatprep.subr.mxu0 0.0
        %361 = vmatpush1.msra.mxu0 0.0
        %362 = vmatprep.subr.mxu0 0.0
        %363 = vmatpush1.msra.mxu0 0.0
        %364 = vmatprep.subr.mxu0 0.0
        %365 = vmatpush1.msra.mxu0 0.0
        %366 = vmatprep.mubr.f32.mxu0 0.0
        %367 = vmatmul.mubr.f32.gmra.mrb[0].mxu0 %v300
        %v368 = vpop.f32.mrb[0].mxu0
        %v369 = vadd.f32 %v267, %v368
        %v370 = vpop.f32.mrb[0].mxu0
        %371 = vdwg.mxu0
        %v372 = vmax.f32 %v369, 0.0
        %v373 = vld [vmem:[%s3] sm:$0xf]
        %v374 = vld [vmem:[%s4] sm:$0x1]
        %vm375 = vcmask 31744
        %v377 = vsel %vm375, %v372, 0
        %vm379 = vcmask 1043456
        %v381 = vsel %vm379, %v373, 0
        %383 = vmatprep.subr.mxu0 0.0
        %384 = vmatpush1.msra.mxu0 %v381
        %385 = vmatprep.subr.mxu0 0.0
        %386 = vmatpush1.msra.mxu0 0.0
        %387 = vmatprep.subr.mxu0 0.0
        %388 = vmatpush1.msra.mxu0 0.0
        %389 = vmatprep.subr.mxu0 0.0
        %390 = vmatpush1.msra.mxu0 0.0
        %391 = vmatprep.subr.mxu0 0.0
        %392 = vmatpush1.msra.mxu0 0.0
        %393 = vmatprep.subr.mxu0 0.0
        %394 = vmatpush1.msra.mxu0 0.0
        %395 = vmatprep.subr.mxu0 0.0
        %396 = vmatpush1.msra.mxu0 0.0
        %397 = vmatprep.subr.mxu0 0.0
        %398 = vmatpush1.msra.mxu0 0.0
        %399 = vmatprep.subr.mxu0 0.0
        %400 = vmatpush1.msra.mxu0 0.0
        %401 = vmatprep.subr.mxu0 0.0
        %402 = vmatpush1.msra.mxu0 0.0
        %403 = vmatprep.subr.mxu0 0.0
        %404 = vmatpush1.msra.mxu0 0.0
        %405 = vmatprep.subr.mxu0 0.0
        %406 = vmatpush1.msra.mxu0 0.0
        %407 = vmatprep.subr.mxu0 0.0
        %408 = vmatpush1.msra.mxu0 0.0
        %409 = vmatprep.subr.mxu0 0.0
        %410 = vmatpush1.msra.mxu0 0.0
        %411 = vmatprep.subr.mxu0 0.0
        %412 = vmatpush1.msra.mxu0 0.0
        %413 = vmatprep.subr.mxu0 0.0
        %414 = vmatpush1.msra.mxu0 0.0
        %415 = vmatprep.subr.mxu0 0.0
        %416 = vmatpush1.msra.mxu0 0.0
        %417 = vmatprep.subr.mxu0 0.0
        %418 = vmatpush1.msra.mxu0 0.0
        %419 = vmatprep.subr.mxu0 0.0
        %420 = vmatpush1.msra.mxu0 0.0
        %421 = vmatprep.subr.mxu0 0.0
        %422 = vmatpush1.msra.mxu0 0.0
        %423 = vmatprep.subr.mxu0 0.0
        %424 = vmatpush1.msra.mxu0 0.0
        %425 = vmatprep.subr.mxu0 0.0
        %426 = vmatpush1.msra.mxu0 0.0
        %427 = vmatprep.subr.mxu0 0.0
        %428 = vmatpush1.msra.mxu0 0.0
        %429 = vmatprep.subr.mxu0 0.0
        %430 = vmatpush1.msra.mxu0 0.0
        %431 = vmatprep.subr.mxu0 0.0
        %432 = vmatpush1.msra.mxu0 0.0
        %433 = vmatprep.subr.mxu0 0.0
        %434 = vmatpush1.msra.mxu0 0.0
        %435 = vmatprep.subr.mxu0 0.0
        %436 = vmatpush1.msra.mxu0 0.0
        %437 = vmatprep.subr.mxu0 0.0
        %438 = vmatpush1.msra.mxu0 0.0
        %439 = vmatprep.subr.mxu0 0.0
        %440 = vmatpush1.msra.mxu0 0.0
        %441 = vmatprep.subr.mxu0 0.0
        %442 = vmatpush1.msra.mxu0 0.0
        %443 = vmatprep.subr.mxu0 0.0
        %444 = vmatpush1.msra.mxu0 0.0
        %445 = vmatprep.subr.mxu0 0.0
        %446 = vmatpush1.msra.mxu0 0.0
        %447 = vmatprep.mubr.f32.mxu0 0.0
        %448 = vmatmul.mubr.f32.gmra.mrb[0].mxu0 %v377
        %v449 = vpop.f32.mrb[0].mxu0
        %v450 = vadd.f32 %v374, %v449
        %v451 = vpop.f32.mrb[0].mxu0
        %452 = vdwg.mxu0
        %v453 = vxor.u32 %v450, 2147483648
        %v454 = vmul.f32 %v453, 1.442695
        %v455 = vpow.pop %v454
        %v456 = vadd.f32 %v455, 1.0
        %v457 = vrcp.pop %v456
        %v458 = vmul.f32 1.0, %v457
        %v459 = vlaneseq
        %v460 = vshrl.u32 %v459, 7
        %v461 = vsub.s32 0, %v460
        %v462 = vrot.slane %v458, %v461
        %464 = vbcast.lane.b32.xlu0 %v462, 256
        %v465 = vpop.permute.xlu0 %464
        %s467 = sor.u32 256, 8
        %468 = vbcast.lane.b32.xlu0 %v462, %s467
        %v469 = vpop.permute.xlu0 %468
        %s471 = sor.u32 256, 16
        %472 = vbcast.lane.b32.xlu0 %v462, %s471
        %v473 = vpop.permute.xlu0 %472
        %s475 = sor.u32 256, 24
        %476 = vbcast.lane.b32.xlu0 %v462, %s475
        %v477 = vpop.permute.xlu0 %476
        %v478 = vmul.f32 %v243, %v465
        %v479 = vmul.f32 %v244, %v465
        %v480 = vmul.f32 %v245, %v469
        %v481 = vmul.f32 %v246, %v469
        %v482 = vmul.f32 %v247, %v473
        %v483 = vmul.f32 %v248, %v473
        %v484 = vmul.f32 %v249, %v477
        %v485 = vmul.f32 %v250, %v477
        %486 = vst [vmem:[%s242] sm:$0xff] %v478
        %487 = vst [vmem:[%s242 + $0x8] sm:$0xff] %v479
        %488 = vst [vmem:[%s242 + $0x10] sm:$0xff] %v480
        %489 = vst [vmem:[%s242 + $0x18] sm:$0xff] %v481
        %490 = vst [vmem:[%s242 + $0x20] sm:$0xff] %v482
        %491 = vst [vmem:[%s242 + $0x28] sm:$0xff] %v483
        %492 = vst [vmem:[%s242 + $0x30] sm:$0xff] %v484
        %493 = vst [vmem:[%s242 + $0x38] sm:$0xff] %v485
        %s494 = sand.u32 %s140, 1
        %s495 = scalar_lea.sflag [#allocation4], %s494
        %s496 = sand.u32 %s140, 1
        %s497 = smul.addr %s496, 64
        %s498 = scalar_lea.vmem [#allocation5], %s497
        // Predicated region
        $region45: #{tpu_custom_call.1} parent=39 // pred_check
          %p499 = pneg %p150
        $region46: #{tpu_custom_call.1} parent=39 // pred_check_branch
          %501 = sbr.rel (%p499) target = $region48
        $region47: #{tpu_custom_call.1} parent=39 // pred_region
          %s503 = ssub.s32 1024, 1024
          %504 = vsyncadd %s495, %s503
          %s505 = smul.addr %s22, 8
          %s506 = smul.addr %s505, 128
          %s507 = scalar_lea.hbm %s5, %s506
          %s508 = sshll.u32 %s498, 4
          %s509 = int_to_ptr.vmem [resolvable:$true] %s508
          %514 = dma.vmem_to_hbm [thread:$0]  %s509, 1024, %s507, %s495, 256, 256, 16
        $region48: #{tpu_custom_call.1} parent=39 // pred_fallthru
          _
      $region40: #{tpu_custom_call.1} parent=5 // pred_fallthru
        _
      %p515 = scmp.le.s32.totalorder 2, %s17
      // Predicated region
      $region49: #{tpu_custom_call.1} parent=5 // pred_check
        %p516 = pneg %p515
      $region50: #{tpu_custom_call.1} parent=5 // pred_check_branch
        %518 = sbr.rel (%p516) target = $region52
      $region51: #{tpu_custom_call.1} parent=5 // pred_region
        %s519 = ssub.s32 %s17, 2
        // Predicated region
        $region53: #{tpu_custom_call.1} parent=51 // pred_check
          %p520 = pneg %p156
        $region54: #{tpu_custom_call.1} parent=51 // pred_check_branch
          %522 = sbr.rel (%p520) target = $region56
        $region55: #{tpu_custom_call.1} parent=51 // pred_region
          %s523 = sand.u32 %s141, 1
          %s524 = scalar_lea.sflag [#allocation4], %s523
          %s525 = sand.u32 %s141, 1
          %s526 = smul.addr %s525, 64
          %s527 = scalar_lea.vmem [#allocation5], %s526
          %528 = dma.done %s524, 1024
        $region56: #{tpu_custom_call.1} parent=51 // pred_fallthru
          _
      $region52: #{tpu_custom_call.1} parent=5 // pred_fallthru
        _
    $region6: #{tpu_custom_call.1} parent=1 // loop_footer
      %s21 = sadd.s32 1, %s17
    $region7: #{tpu_custom_call.1} parent=1 // loop_footer_branch
      %16 = sbr.rel target = $region3
    $region8: #{tpu_custom_call.1} parent=1 // loop_exit
      _
    %529 = vsyncpa [#allocation3], 1
    %s530 = scalar_lea.sflag [#allocation3], 1
    %531 = vsyncpa %s530, 1
    %532 = vsyncpa [#allocation4], 1
    %s533 = scalar_lea.sflag [#allocation4], 1
    %534 = vsyncpa %s533, 1

</llo_original>
